<compile_context>
chip_gen: v7x
topology: tpu7x:2x2x1
jax: 0.10.0
libtpu: 0.0.40
codegen_flags: <defaults>
</compile_context>

<pallas_src>
import math
from functools import partial

import jax
import jax.numpy as jnp
from jax.experimental import pallas as pl
from jax.experimental.pallas import tpu as pltpu


def _sinusoidal_pos_emb_kernel(pm_ref, freqs_ref, o_ref, *, half_dim, embedding_dim):
    pos = pm_ref[:, 0:1]          # [TR, 1] f32 positions (garbage ok on padded rows)
    mask = pm_ref[:, 1:2]         # [TR, 1] f32 (1.0 for real tokens, 0.0 for padding)
    freqs = freqs_ref[...]        # [1, half_dim] f32 precomputed frequencies

    arg = pos * freqs             # [TR, half_dim] broadcast multiply (VPU)
    # Write the two halves in place (no lane-axis concat / extra VMEM copy).
    o_ref[:, :half_dim] = jnp.sin(arg) * mask
    o_ref[:, half_dim:2 * half_dim] = jnp.cos(arg) * mask
    if embedding_dim % 2 == 1:
        # reference appends a zero column for odd embedding_dim
        o_ref[:, 2 * half_dim:] = jnp.zeros((pm_ref.shape[0], 1), jnp.float32)


def sinusoidal_positional_embedding(tokens, embedding_dim, padding_idx=0,
                                    left_pad=0, max_row_tile=8192,
                                    vmem_budget_bytes=16 * 1024 * 1024):
    """Pallas equivalent of SinusoidalPositionalEmbedding.forward.

    tokens: [bsz, seq_len] int32 -> returns [bsz, seq_len, embedding_dim] f32.
    """
    bsz, seq_len = tokens.shape
    half_dim = embedding_dim // 2
    assert half_dim > 1, "embedding_dim must be >= 4 (reference divides by half_dim - 1)"

    # ---- make_positions, done wrapper-side so the kernel can tile over rows ----
    positions = jnp.arange(padding_idx + 1, padding_idx + 1 + seq_len, dtype=jnp.int32)
    positions = jnp.broadcast_to(positions[None, :], (bsz, seq_len))
    mask = tokens != padding_idx
    if left_pad:
        nonpad = jnp.sum(mask.astype(jnp.int32), axis=1, keepdims=True)
        positions = positions - seq_len + nonpad
    # No need to select padding_idx for padded rows: the mask multiply in the
    # kernel zeroes those output rows (matching the zeroed table row).
    num_rows = bsz * seq_len
    # Pack (position, mask) into one [R, 2] stream -> single input DMA per tile.
    pm = jnp.stack([positions.astype(jnp.float32),
                    mask.astype(jnp.float32)], axis=-1).reshape(num_rows, 2)

    # ---- frequency row (identical math to get_embedding), computed once ----
    scale = math.log(10000.0) / (half_dim - 1)
    freqs = jnp.exp(jnp.arange(half_dim, dtype=jnp.float32) * -scale)
    freqs = freqs.reshape(1, half_dim)

    # ---- adaptive row tiling: pick the biggest tile that fits the VMEM budget ----
    # Per-buffer VMEM per row (lane-padded to 128): output block + packed pm block,
    # both double-buffered by the BlockSpec pipeline.
    lanes_out = ((embedding_dim + 127) // 128) * 128
    per_row_vmem = 4 * (lanes_out + 128) * 2
    tr_cap = max(8, min(max_row_tile, vmem_budget_bytes // per_row_vmem))
    tr_cap = (tr_cap // 8) * 8                              # (8,128) sublane rule
    tr = num_rows if num_rows <= tr_cap else tr_cap
    grid = (pl.cdiv(num_rows, tr),)

    # TODO(synk): for embedding_dim < 128 the output stores are lane-masked
    #             (vst.msk); a lane-dense repack of the [R, E] slab would need an
    #             in-kernel cross-lane broadcast of pos and is not worth it for a
    #             kernel already bound by HBM writeback of the output.
    kernel = partial(_sinusoidal_pos_emb_kernel,
                     half_dim=half_dim, embedding_dim=embedding_dim)

    out_flat = pl.pallas_call(
        kernel,
        out_shape=jax.ShapeDtypeStruct((num_rows, embedding_dim), jnp.float32),
        grid=grid,
        in_specs=[
            pl.BlockSpec((tr, 2), lambda i: (i, 0)),          # packed (pos, mask)
            pl.BlockSpec((1, half_dim), lambda i: (0, 0)),    # freqs (resident)
        ],
        out_specs=pl.BlockSpec((tr, embedding_dim), lambda i: (i, 0)),
        compiler_params=pltpu.CompilerParams(
            dimension_semantics=("parallel",)),
        cost_estimate=pl.CostEstimate(
            flops=3 * num_rows * embedding_dim,
            transcendentals=num_rows * embedding_dim,
            bytes_accessed=4 * (num_rows * embedding_dim + 2 * num_rows + half_dim),
        ),
    )(pm, freqs)

    return out_flat.reshape(bsz, seq_len, embedding_dim)


def _reference(tokens, embedding_dim, padding_idx=0, left_pad=0):
    """Pure-JAX port of the torch module (table build + make_positions + gather)."""
    bsz, seq_len = tokens.shape
    num_emb = padding_idx + 1 + seq_len
    half = embedding_dim // 2
    e = math.log(10000.0) / (half - 1)
    e = jnp.exp(jnp.arange(half, dtype=jnp.float32) * -e)
    e = jnp.arange(num_emb, dtype=jnp.float32)[:, None] * e[None, :]
    table = jnp.concatenate([jnp.sin(e), jnp.cos(e)], axis=1)
    if embedding_dim % 2 == 1:
        table = jnp.concatenate([table, jnp.zeros((num_emb, 1), jnp.float32)], axis=1)
    table = table.at[padding_idx].set(0.0)
    positions = jnp.arange(padding_idx + 1, padding_idx + 1 + seq_len, dtype=jnp.int32)
    positions = jnp.broadcast_to(positions[None, :], (bsz, seq_len))
    mask = tokens != padding_idx
    if left_pad:
        positions = positions - seq_len + mask.sum(axis=1, keepdims=True)
    pos = jnp.where(mask, positions, padding_idx)
    return table[pos.reshape(-1)].reshape(bsz, seq_len, embedding_dim)


if __name__ == "__main__":
    key = jax.random.PRNGKey(0)
    bsz, seq_len, embedding_dim, padding_idx = 2, 8, 32, 0

    # right-padded example
    tokens = jax.random.randint(key, (bsz, seq_len), 1, 20, dtype=jnp.int32)
    tokens = tokens.at[0, 6:].set(padding_idx)
    tokens = tokens.at[1, 4:].set(padding_idx)

    out = sinusoidal_positional_embedding(tokens, embedding_dim, padding_idx, left_pad=0)
    out = jax.block_until_ready(out)
    ref = _reference(tokens, embedding_dim, padding_idx, left_pad=0)
    assert out.shape == (bsz, seq_len, embedding_dim)
    assert out.dtype == jnp.float32
    assert jnp.allclose(out, ref, atol=1e-5, rtol=1e-5)

    # left-padded example
    tokens_l = jax.random.randint(jax.random.PRNGKey(1), (bsz, seq_len), 1, 20,
                                  dtype=jnp.int32)
    tokens_l = tokens_l.at[0, :3].set(padding_idx)
    tokens_l = tokens_l.at[1, :1].set(padding_idx)

    out_l = sinusoidal_positional_embedding(tokens_l, embedding_dim, padding_idx, left_pad=1)
    out_l = jax.block_until_ready(out_l)
    ref_l = _reference(tokens_l, embedding_dim, padding_idx, left_pad=1)
    assert jnp.allclose(out_l, ref_l, atol=1e-5, rtol=1e-5)

    # odd embedding_dim (exercises the appended zero column)
    out_odd = sinusoidal_positional_embedding(tokens, 33, padding_idx, left_pad=0)
    out_odd = jax.block_until_ready(out_odd)
    ref_odd = _reference(tokens, 33, padding_idx, left_pad=0)
    assert jnp.allclose(out_odd, ref_odd, atol=1e-5, rtol=1e-5)

    print("KERNEL_OK")
</pallas_src>

<mosaic_0001>
module attributes {stable_mosaic.version = 11 : i64} {
  func.func @_sinusoidal_pos_emb_kernel(%arg0: i32, %arg1: memref<16x2xf32, #tpu.memory_space<vmem>>, %arg2: memref<1x16xf32, #tpu.memory_space<vmem>>, %arg3: memref<16x32xf32, #tpu.memory_space<vmem>>) attributes {dimension_semantics = [#tpu.dimension_semantics<parallel>], iteration_bounds = array<i64: 1>, scalar_prefetch = 0 : i64, scratch_operands = 0 : i64, tpu.core_type = #tpu.core_type<tc>, window_params = [{transform_indices = @transform_0, window_bounds = array<i64: 16, 2>}, {pipeline_mode = #tpu.pipeline_mode<synchronous>, transform_indices = @transform_1, window_bounds = array<i64: 1, 16>}, {transform_indices = @transform_2, window_bounds = array<i64: 16, 32>}]} {
    %c0 = arith.constant 0 : index
    %c0_0 = arith.constant 0 : index
    %0 = vector.load %arg1[%c0, %c0_0] : memref<16x2xf32, #tpu.memory_space<vmem>>, vector<16x1xf32>
    %c0_1 = arith.constant 0 : index
    %c1 = arith.constant 1 : index
    %1 = vector.load %arg1[%c0_1, %c1] : memref<16x2xf32, #tpu.memory_space<vmem>>, vector<16x1xf32>
    %c0_2 = arith.constant 0 : index
    %c0_3 = arith.constant 0 : index
    %2 = vector.load %arg2[%c0_2, %c0_3] : memref<1x16xf32, #tpu.memory_space<vmem>>, vector<1x16xf32>
    %3 = vector.broadcast %0 : vector<16x1xf32> to vector<16x16xf32>
    %4 = vector.broadcast %2 : vector<1x16xf32> to vector<16x16xf32>
    %5 = arith.mulf %3, %4 : vector<16x16xf32>
    %6 = math.sin %5 : vector<16x16xf32>
    %7 = vector.broadcast %1 : vector<16x1xf32> to vector<16x16xf32>
    %8 = arith.mulf %6, %7 : vector<16x16xf32>
    %c0_4 = arith.constant 0 : index
    %c0_5 = arith.constant 0 : index
    %9 = vector.load %arg3[%c0_4, %c0_5] : memref<16x32xf32, #tpu.memory_space<vmem>>, vector<16x16xf32>
    tpu.vector_store %arg3[%c0_4, %c0_5], %8 {strides = array<i32>} : memref<16x32xf32, #tpu.memory_space<vmem>>, vector<16x16xf32>,
    %10 = math.cos %5 : vector<16x16xf32>
    %11 = vector.broadcast %1 : vector<16x1xf32> to vector<16x16xf32>
    %12 = arith.mulf %10, %11 : vector<16x16xf32>
    %c0_6 = arith.constant 0 : index
    %c16 = arith.constant 16 : index
    %13 = vector.load %arg3[%c0_6, %c16] : memref<16x32xf32, #tpu.memory_space<vmem>>, vector<16x16xf32>
    tpu.vector_store %arg3[%c0_6, %c16], %12 {strides = array<i32>} : memref<16x32xf32, #tpu.memory_space<vmem>>, vector<16x16xf32>,
    return
  }
  func.func @transform_0(%arg0: i32) -> (i32, i32) {
    %c0_i32 = arith.constant 0 : i32
    %c0_i32_0 = arith.constant 0 : i32
    return %arg0, %c0_i32 : i32, i32
  }
  func.func @transform_1(%arg0: i32) -> (i32, i32) {
    %c0_i32 = arith.constant 0 : i32
    %c0_i32_0 = arith.constant 0 : i32
    %c0_i32_1 = arith.constant 0 : i32
    return %c0_i32, %c0_i32_0 : i32, i32
  }
  func.func @transform_2(%arg0: i32) -> (i32, i32) {
    %c0_i32 = arith.constant 0 : i32
    %c0_i32_0 = arith.constant 0 : i32
    return %arg0, %c0_i32 : i32, i32
  }
}

</mosaic_0001>

<llo_original>
// kernel: tpu_custom_call.1
$region0: #{tpu_custom_call.1}
  #allocation0 [shape = 'u32[]', space=smem, size = 0x4, offset = 0x4, fixed_abs, tag = 'smem constant byte address 0x4 - core index']
  #allocation1 [shape = 'u32[144,128]{1,0:T(1,128)}', space=vmem, size = 0x12000, scoped, tag = 'internal scratch']
  %s0 = inlined_call_operand.vmem [shape: f32[16,2], index: 0, kind: input, shape index: {}]
  %s1 = inlined_call_operand.vmem [shape: f32[1,16], index: 1, kind: input, shape index: {}]
  %s2 = inlined_call_operand.hbm [shape: f32[16,32], index: 2, kind: output, shape index: {}]
  %s3 = sld [smem:[#allocation0]]
  $region18: #{tpu_custom_call.1} parent=0
    _
  %s5 = ssub.s32 1, %s3
  %s6 = scalar_select 0, %s5, %s3
  $region1: #{tpu_custom_call.1} parent=0
    #allocation2 [shape = 'u8[8192]{0}', space=vmem, size = 0x2000, scoped, tag = 'output window, operand 0, single buffered']
    #allocation3 [shape = 's32[1]{0}', space=sflag, size = 0x4, scoped, tag = 'scoped memory for tpu_custom_call.1']
    %7 = vsyncpa [#allocation3], 0
    // Predicated region
    $region2: #{tpu_custom_call.1} parent=1 // pred_check
      _
    $region3: #{tpu_custom_call.1} parent=1 // pred_check_branch
      %9 = sbr.rel (0) target = $region5
    $region4: #{tpu_custom_call.1} parent=1 // pred_region
      _
    $region5: #{tpu_custom_call.1} parent=1 // pred_fallthru
      _
    // Predicated region
    $region6: #{tpu_custom_call.1} parent=1 // pred_check
      _
    $region7: #{tpu_custom_call.1} parent=1 // pred_check_branch
      %11 = sbr.rel (0) target = $region9
    $region8: #{tpu_custom_call.1} parent=1 // pred_region
      _
    $region9: #{tpu_custom_call.1} parent=1 // pred_fallthru
      _
    %v12 = vld [vmem:[%s0] sm:$0xff]
    %v13 = vld [vmem:[%s0 + $0x8] sm:$0xff]
    %v14 = vld [vmem:[%s1] sm:$0x1]
    %16 = vset.pattern.permute.xlu0 0
    %17 = vperm.xlu0 %16, %v12
    %v18 = vpop.permute.xlu0 %17
    %21 = vset.pattern.permute.xlu0 0
    %22 = vperm.xlu0 %21, %v13
    %v23 = vpop.permute.xlu0 %22
    %v26 = vlaneseq
    %v27 = vshrl.u32 %v26, 7
    %v28 = vsub.s32 0, %v27
    %v29 = vrot.slane %v14, %v28
    %v31 = vmul.f32 %v18, %v29
    %v32 = vmul.f32 %v23, %v29
    %v33 = vand.u32 2147483647, %v31
    %vm34 = vcmp.le.f32.partialorder %v33, 0.7853982
    %vm35 = vcmp.lt.s32.totalorder %v31, 0
    %v36 = vand.u32 %v31, 2139095040
    %v37 = vshrl.u32 %v36, 23
    %v38 = vsub.s32 %v37, 127
    %v39 = vand.u32 2147483647, %v31
    %v40 = vand.u32 %v39, 8388607
    %v41 = vor.u32 %v40, 8388608
    %v42 = vsub.s32 0, %v41
    %v43 = vadd.s32 %v38, 1
    %vm44 = vcmp.gt.s32.totalorder %v43, 0
    %v45 = vsel %vm44, %v43, 0
    %v46 = vshrl.u32 %v45, 5
    %v47 = vand.u32 %v45, 31
    %v48 = vsub.s32 32, %v47
    %v49 = vshrl.u32 683565275, %v48
    %v50 = vshll.u32 683565275, %v47
    %v51 = vshrl.u32 2475754826, %v48
    %v52 = vor.u32 %v50, %v51
    %v53 = vshll.u32 2475754826, %v47
    %v54 = vshrl.u32 2131351028, %v48
    %v55 = vor.u32 %v53, %v54
    %v56 = vshll.u32 2131351028, %v47
    %v57 = vshrl.u32 2102212464, %v48
    %v58 = vor.u32 %v56, %v57
    %v59 = vshll.u32 2102212464, %v47
    %v60 = vshrl.u32 920167782, %v48
    %v61 = vor.u32 %v59, %v60
    %v62 = vshll.u32 920167782, %v47
    %v63 = vshrl.u32 1326507024, %v48
    %v64 = vor.u32 %v62, %v63
    %vm65 = vcmp.lt.s32.totalorder %v46, 1
    %vm66 = vcmp.lt.s32.totalorder %v46, 2
    %vm67 = vcmp.lt.s32.totalorder %v46, 3
    %vm68 = vcmp.lt.s32.totalorder %v46, 4
    %v69 = vsel %vm65, %v49, %v52
    %v70 = vsel %vm68, %v58, 2102212464
    %v71 = vsel %vm67, %v55, %v70
    %v72 = vsel %vm66, %v69, %v71
    %v73 = vsel %vm65, %v52, %v55
    %v74 = vsel %vm68, %v61, 920167782
    %v75 = vsel %vm67, %v58, %v74
    %v76 = vsel %vm66, %v73, %v75
    %v77 = vsel %vm65, %v55, %v58
    %v78 = vsel %vm68, %v64, 1326507024
    %v79 = vsel %vm67, %v61, %v78
    %v80 = vsel %vm66, %v77, %v79
    %v81 = vshll.u32 %v41, 8
    %v82 = vmul.u32.u64.compose %v81, %v80
    %v83 = vextract.low.u32 %v82
    %v84 = vextract.high.u32 %v82
    %v85 = vmul.u32.u64.compose %v81, %v76
    %v86 = vextract.low.u32 %v85
    %v87 = vextract.high.u32 %v85
    %v88 = vmul.u32 %v81, %v72
    %v89 = vadd.s32 %v84, %v86
    %vm90 = vc.u32 %v84, %v86
    %v91 = vadd.s32 %v87, 1
    %v92 = vsel %vm90, %v91, %v87
    %v93 = vadd.s32 %v88, %v92
    %v94 = vadd.s32 %v93, 536870912
    %v95 = vshrl.u32 %v94, 30
    %v96 = vshll.u32 %v95, 30
    %v97 = vsub.s32 %v93, %v96
    %vm98 = vcmp.lt.s32.totalorder %v97, 0
    %v99 = vsub.s32 0, %v97
    %v100 = vsel %vm98, %v99, %v97
    %v101 = vclz %v100
    %v102 = vsub.s32 %v101, 2
    %vm103 = vcmp.gt.s32.totalorder 0, %v102
    %v104 = vsel %vm103, 0, %v102
    %v105 = vsub.s32 32, %v104
    %v106 = vshll.u32 %v97, %v104
    %v107 = vshrl.u32 %v89, %v105
    %v108 = vor.u32 %v106, %v107
    %v109 = vsub.s32 4294967266, %v104
    %v110 = vadd.s32 %v109, 127
    %v111 = vshll.u32 %v110, 23
    %v112 = vor.u32 4788187, %v111
    %v113 = vand.u32 2147483647, %v112
    %v115 = vcvt.s32.f32 %v108
    %v116 = vmul.f32 %v115, %v113
    %v117 = vxor.u32 %v116, 2147483648
    %v118 = vsel %vm35, %v117, %v116
    %v119 = vsub.s32 4, %v95
    %v120 = vsel %vm35, %v119, %v95
    %v121 = vsel %vm34, %v31, %v118
    %v122 = vsel %vm34, 0, %v120
    %v123 = vcosq.f32.pop %v121
    %v124 = vsinq.f32.pop %v121
    %vm125 = vweird.f32 %v31
    %v126 = vadd.s32 %v122, 3
    %v127 = vand.u32 %v126, 3
    %vm128 = vcmp.lt.s32.totalorder %v127, 2
    %vm129 = vcmp.eq.s32.totalorder %v127, 0
    %v130 = vxor.u32 %v124, 2147483648
    %v131 = vsel %vm129, %v123, %v130
    %vm132 = vcmp.eq.s32.totalorder %v127, 2
    %v133 = vxor.u32 %v123, 2147483648
    %v134 = vsel %vm132, %v133, %v124
    %v135 = vsel %vm128, %v131, %v134
    %v136 = vsel %vm125, nan, %v135
    %v137 = vand.u32 2147483647, %v32
    %vm138 = vcmp.le.f32.partialorder %v137, 0.7853982
    %vm139 = vcmp.lt.s32.totalorder %v32, 0
    %v140 = vand.u32 %v32, 2139095040
    %v141 = vshrl.u32 %v140, 23
    %v142 = vsub.s32 %v141, 127
    %v143 = vand.u32 2147483647, %v32
    %v144 = vand.u32 %v143, 8388607
    %v145 = vor.u32 %v144, 8388608
    %v146 = vsub.s32 0, %v145
    %v147 = vadd.s32 %v142, 1
    %vm148 = vcmp.gt.s32.totalorder %v147, 0
    %v149 = vsel %vm148, %v147, 0
    %v150 = vshrl.u32 %v149, 5
    %v151 = vand.u32 %v149, 31
    %v152 = vsub.s32 32, %v151
    %v153 = vshrl.u32 683565275, %v152
    %v154 = vshll.u32 683565275, %v151
    %v155 = vshrl.u32 2475754826, %v152
    %v156 = vor.u32 %v154, %v155
    %v157 = vshll.u32 2475754826, %v151
    %v158 = vshrl.u32 2131351028, %v152
    %v159 = vor.u32 %v157, %v158
    %v160 = vshll.u32 2131351028, %v151
    %v161 = vshrl.u32 2102212464, %v152
    %v162 = vor.u32 %v160, %v161
    %v163 = vshll.u32 2102212464, %v151
    %v164 = vshrl.u32 920167782, %v152
    %v165 = vor.u32 %v163, %v164
    %v166 = vshll.u32 920167782, %v151
    %v167 = vshrl.u32 1326507024, %v152
    %v168 = vor.u32 %v166, %v167
    %vm169 = vcmp.lt.s32.totalorder %v150, 1
    %vm170 = vcmp.lt.s32.totalorder %v150, 2
    %vm171 = vcmp.lt.s32.totalorder %v150, 3
    %vm172 = vcmp.lt.s32.totalorder %v150, 4
    %v173 = vsel %vm169, %v153, %v156
    %v174 = vsel %vm172, %v162, 2102212464
    %v175 = vsel %vm171, %v159, %v174
    %v176 = vsel %vm170, %v173, %v175
    %v177 = vsel %vm169, %v156, %v159
    %v178 = vsel %vm172, %v165, 920167782
    %v179 = vsel %vm171, %v162, %v178
    %v180 = vsel %vm170, %v177, %v179
    %v181 = vsel %vm169, %v159, %v162
    %v182 = vsel %vm172, %v168, 1326507024
    %v183 = vsel %vm171, %v165, %v182
    %v184 = vsel %vm170, %v181, %v183
    %v185 = vshll.u32 %v145, 8
    %v186 = vmul.u32.u64.compose %v185, %v184
    %v187 = vextract.low.u32 %v186
    %v188 = vextract.high.u32 %v186
    %v189 = vmul.u32.u64.compose %v185, %v180
    %v190 = vextract.low.u32 %v189
    %v191 = vextract.high.u32 %v189
    %v192 = vmul.u32 %v185, %v176
    %v193 = vadd.s32 %v188, %v190
    %vm194 = vc.u32 %v188, %v190
    %v195 = vadd.s32 %v191, 1
    %v196 = vsel %vm194, %v195, %v191
    %v197 = vadd.s32 %v192, %v196
    %v198 = vadd.s32 %v197, 536870912
    %v199 = vshrl.u32 %v198, 30
    %v200 = vshll.u32 %v199, 30
    %v201 = vsub.s32 %v197, %v200
    %vm202 = vcmp.lt.s32.totalorder %v201, 0
    %v203 = vsub.s32 0, %v201
    %v204 = vsel %vm202, %v203, %v201
    %v205 = vclz %v204
    %v206 = vsub.s32 %v205, 2
    %vm207 = vcmp.gt.s32.totalorder 0, %v206
    %v208 = vsel %vm207, 0, %v206
    %v209 = vsub.s32 32, %v208
    %v210 = vshll.u32 %v201, %v208
    %v211 = vshrl.u32 %v193, %v209
    %v212 = vor.u32 %v210, %v211
    %v213 = vsub.s32 4294967266, %v208
    %v214 = vadd.s32 %v213, 127
    %v215 = vshll.u32 %v214, 23
    %v216 = vor.u32 4788187, %v215
    %v217 = vand.u32 2147483647, %v216
    %v219 = vcvt.s32.f32 %v212
    %v220 = vmul.f32 %v219, %v217
    %v221 = vxor.u32 %v220, 2147483648
    %v222 = vsel %vm139, %v221, %v220
    %v223 = vsub.s32 4, %v199
    %v224 = vsel %vm139, %v223, %v199
    %v225 = vsel %vm138, %v32, %v222
    %v226 = vsel %vm138, 0, %v224
    %v227 = vcosq.f32.pop %v225
    %v228 = vsinq.f32.pop %v225
    %vm229 = vweird.f32 %v32
    %v230 = vadd.s32 %v226, 3
    %v231 = vand.u32 %v230, 3
    %vm232 = vcmp.lt.s32.totalorder %v231, 2
    %vm233 = vcmp.eq.s32.totalorder %v231, 0
    %v234 = vxor.u32 %v228, 2147483648
    %v235 = vsel %vm233, %v227, %v234
    %vm236 = vcmp.eq.s32.totalorder %v231, 2
    %v237 = vxor.u32 %v227, 2147483648
    %v238 = vsel %vm236, %v237, %v228
    %v239 = vsel %vm232, %v235, %v238
    %v240 = vsel %vm229, nan, %v239
    %241 = vset.pattern.permute.xlu0 1
    %242 = vperm.xlu0 %241, %v12
    %v243 = vpop.permute.xlu0 %242
    %245 = vset.pattern.permute.xlu0 1
    %246 = vperm.xlu0 %245, %v13
    %v247 = vpop.permute.xlu0 %246
    %v249 = vmul.f32 %v136, %v243
    %v250 = vmul.f32 %v240, %v247
    %vm251 = vcmask 130048
    %252 = vst.msk [vmem:[#allocation2] sm:$0xff] %vm251, %v249
    %253 = vst.msk [vmem:[#allocation2 + $0x8] sm:$0xff] %vm251, %v250
    %v254 = vand.u32 2147483647, %v31
    %vm255 = vcmp.le.f32.partialorder %v254, 0.7853982
    %vm256 = vcmp.lt.s32.totalorder %v31, 0
    %v257 = vand.u32 %v31, 2139095040
    %v258 = vshrl.u32 %v257, 23
    %v259 = vsub.s32 %v258, 127
    %v260 = vand.u32 2147483647, %v31
    %v261 = vand.u32 %v260, 8388607
    %v262 = vor.u32 %v261, 8388608
    %v263 = vsub.s32 0, %v262
    %v264 = vadd.s32 %v259, 1
    %vm265 = vcmp.gt.s32.totalorder %v264, 0
    %v266 = vsel %vm265, %v264, 0
    %v267 = vshrl.u32 %v266, 5
    %v268 = vand.u32 %v266, 31
    %v269 = vsub.s32 32, %v268
    %v270 = vshrl.u32 683565275, %v269
    %v271 = vshll.u32 683565275, %v268
    %v272 = vshrl.u32 2475754826, %v269
    %v273 = vor.u32 %v271, %v272
    %v274 = vshll.u32 2475754826, %v268
    %v275 = vshrl.u32 2131351028, %v269
    %v276 = vor.u32 %v274, %v275
    %v277 = vshll.u32 2131351028, %v268
    %v278 = vshrl.u32 2102212464, %v269
    %v279 = vor.u32 %v277, %v278
    %v280 = vshll.u32 2102212464, %v268
    %v281 = vshrl.u32 920167782, %v269
    %v282 = vor.u32 %v280, %v281
    %v283 = vshll.u32 920167782, %v268
    %v284 = vshrl.u32 1326507024, %v269
    %v285 = vor.u32 %v283, %v284
    %vm286 = vcmp.lt.s32.totalorder %v267, 1
    %vm287 = vcmp.lt.s32.totalorder %v267, 2
    %vm288 = vcmp.lt.s32.totalorder %v267, 3
    %vm289 = vcmp.lt.s32.totalorder %v267, 4
    %v290 = vsel %vm286, %v270, %v273
    %v291 = vsel %vm289, %v279, 2102212464
    %v292 = vsel %vm288, %v276, %v291
    %v293 = vsel %vm287, %v290, %v292
    %v294 = vsel %vm286, %v273, %v276
    %v295 = vsel %vm289, %v282, 920167782
    %v296 = vsel %vm288, %v279, %v295
    %v297 = vsel %vm287, %v294, %v296
    %v298 = vsel %vm286, %v276, %v279
    %v299 = vsel %vm289, %v285, 1326507024
    %v300 = vsel %vm288, %v282, %v299
    %v301 = vsel %vm287, %v298, %v300
    %v302 = vshll.u32 %v262, 8
    %v303 = vmul.u32.u64.compose %v302, %v301
    %v304 = vextract.low.u32 %v303
    %v305 = vextract.high.u32 %v303
    %v306 = vmul.u32.u64.compose %v302, %v297
    %v307 = vextract.low.u32 %v306
    %v308 = vextract.high.u32 %v306
    %v309 = vmul.u32 %v302, %v293
    %v310 = vadd.s32 %v305, %v307
    %vm311 = vc.u32 %v305, %v307
    %v312 = vadd.s32 %v308, 1
    %v313 = vsel %vm311, %v312, %v308
    %v314 = vadd.s32 %v309, %v313
    %v315 = vadd.s32 %v314, 536870912
    %v316 = vshrl.u32 %v315, 30
    %v317 = vshll.u32 %v316, 30
    %v318 = vsub.s32 %v314, %v317
    %vm319 = vcmp.lt.s32.totalorder %v318, 0
    %v320 = vsub.s32 0, %v318
    %v321 = vsel %vm319, %v320, %v318
    %v322 = vclz %v321
    %v323 = vsub.s32 %v322, 2
    %vm324 = vcmp.gt.s32.totalorder 0, %v323
    %v325 = vsel %vm324, 0, %v323
    %v326 = vsub.s32 32, %v325
    %v327 = vshll.u32 %v318, %v325
    %v328 = vshrl.u32 %v310, %v326
    %v329 = vor.u32 %v327, %v328
    %v330 = vsub.s32 4294967266, %v325
    %v331 = vadd.s32 %v330, 127
    %v332 = vshll.u32 %v331, 23
    %v333 = vor.u32 4788187, %v332
    %v334 = vand.u32 2147483647, %v333
    %v336 = vcvt.s32.f32 %v329
    %v337 = vmul.f32 %v336, %v334
    %v338 = vxor.u32 %v337, 2147483648
    %v339 = vsel %vm256, %v338, %v337
    %v340 = vsub.s32 4, %v316
    %v341 = vsel %vm256, %v340, %v316
    %v342 = vsel %vm255, %v31, %v339
    %v343 = vsel %vm255, 0, %v341
    %v344 = vcosq.f32.pop %v342
    %v345 = vsinq.f32.pop %v342
    %vm346 = vweird.f32 %v31
    %v347 = vand.u32 %v343, 3
    %vm348 = vcmp.lt.s32.totalorder %v347, 2
    %vm349 = vcmp.eq.s32.totalorder %v347, 0
    %v350 = vxor.u32 %v345, 2147483648
    %v351 = vsel %vm349, %v344, %v350
    %vm352 = vcmp.eq.s32.totalorder %v347, 2
    %v353 = vxor.u32 %v344, 2147483648
    %v354 = vsel %vm352, %v353, %v345
    %v355 = vsel %vm348, %v351, %v354
    %v356 = vsel %vm346, nan, %v355
    %v357 = vand.u32 2147483647, %v32
    %vm358 = vcmp.le.f32.partialorder %v357, 0.7853982
    %vm359 = vcmp.lt.s32.totalorder %v32, 0
    %v360 = vand.u32 %v32, 2139095040
    %v361 = vshrl.u32 %v360, 23
    %v362 = vsub.s32 %v361, 127
    %v363 = vand.u32 2147483647, %v32
    %v364 = vand.u32 %v363, 8388607
    %v365 = vor.u32 %v364, 8388608
    %v366 = vsub.s32 0, %v365
    %v367 = vadd.s32 %v362, 1
    %vm368 = vcmp.gt.s32.totalorder %v367, 0
    %v369 = vsel %vm368, %v367, 0
    %v370 = vshrl.u32 %v369, 5
    %v371 = vand.u32 %v369, 31
    %v372 = vsub.s32 32, %v371
    %v373 = vshrl.u32 683565275, %v372
    %v374 = vshll.u32 683565275, %v371
    %v375 = vshrl.u32 2475754826, %v372
    %v376 = vor.u32 %v374, %v375
    %v377 = vshll.u32 2475754826, %v371
    %v378 = vshrl.u32 2131351028, %v372
    %v379 = vor.u32 %v377, %v378
    %v380 = vshll.u32 2131351028, %v371
    %v381 = vshrl.u32 2102212464, %v372
    %v382 = vor.u32 %v380, %v381
    %v383 = vshll.u32 2102212464, %v371
    %v384 = vshrl.u32 920167782, %v372
    %v385 = vor.u32 %v383, %v384
    %v386 = vshll.u32 920167782, %v371
    %v387 = vshrl.u32 1326507024, %v372
    %v388 = vor.u32 %v386, %v387
    %vm389 = vcmp.lt.s32.totalorder %v370, 1
    %vm390 = vcmp.lt.s32.totalorder %v370, 2
    %vm391 = vcmp.lt.s32.totalorder %v370, 3
    %vm392 = vcmp.lt.s32.totalorder %v370, 4
    %v393 = vsel %vm389, %v373, %v376
    %v394 = vsel %vm392, %v382, 2102212464
    %v395 = vsel %vm391, %v379, %v394
    %v396 = vsel %vm390, %v393, %v395
    %v397 = vsel %vm389, %v376, %v379
    %v398 = vsel %vm392, %v385, 920167782
    %v399 = vsel %vm391, %v382, %v398
    %v400 = vsel %vm390, %v397, %v399
    %v401 = vsel %vm389, %v379, %v382
    %v402 = vsel %vm392, %v388, 1326507024
    %v403 = vsel %vm391, %v385, %v402
    %v404 = vsel %vm390, %v401, %v403
    %v405 = vshll.u32 %v365, 8
    %v406 = vmul.u32.u64.compose %v405, %v404
    %v407 = vextract.low.u32 %v406
    %v408 = vextract.high.u32 %v406
    %v409 = vmul.u32.u64.compose %v405, %v400
    %v410 = vextract.low.u32 %v409
    %v411 = vextract.high.u32 %v409
    %v412 = vmul.u32 %v405, %v396
    %v413 = vadd.s32 %v408, %v410
    %vm414 = vc.u32 %v408, %v410
    %v415 = vadd.s32 %v411, 1
    %v416 = vsel %vm414, %v415, %v411
    %v417 = vadd.s32 %v412, %v416
    %v418 = vadd.s32 %v417, 536870912
    %v419 = vshrl.u32 %v418, 30
    %v420 = vshll.u32 %v419, 30
    %v421 = vsub.s32 %v417, %v420
    %vm422 = vcmp.lt.s32.totalorder %v421, 0
    %v423 = vsub.s32 0, %v421
    %v424 = vsel %vm422, %v423, %v421
    %v425 = vclz %v424
    %v426 = vsub.s32 %v425, 2
    %vm427 = vcmp.gt.s32.totalorder 0, %v426
    %v428 = vsel %vm427, 0, %v426
    %v429 = vsub.s32 32, %v428
    %v430 = vshll.u32 %v421, %v428
    %v431 = vshrl.u32 %v413, %v429
    %v432 = vor.u32 %v430, %v431
    %v433 = vsub.s32 4294967266, %v428
    %v434 = vadd.s32 %v433, 127
    %v435 = vshll.u32 %v434, 23
    %v436 = vor.u32 4788187, %v435
    %v437 = vand.u32 2147483647, %v436
    %v439 = vcvt.s32.f32 %v432
    %v440 = vmul.f32 %v439, %v437
    %v441 = vxor.u32 %v440, 2147483648
    %v442 = vsel %vm359, %v441, %v440
    %v443 = vsub.s32 4, %v419
    %v444 = vsel %vm359, %v443, %v419
    %v445 = vsel %vm358, %v32, %v442
    %v446 = vsel %vm358, 0, %v444
    %v447 = vcosq.f32.pop %v445
    %v448 = vsinq.f32.pop %v445
    %vm449 = vweird.f32 %v32
    %v450 = vand.u32 %v446, 3
    %vm451 = vcmp.lt.s32.totalorder %v450, 2
    %vm452 = vcmp.eq.s32.totalorder %v450, 0
    %v453 = vxor.u32 %v448, 2147483648
    %v454 = vsel %vm452, %v447, %v453
    %vm455 = vcmp.eq.s32.totalorder %v450, 2
    %v456 = vxor.u32 %v447, 2147483648
    %v457 = vsel %vm455, %v456, %v448
    %v458 = vsel %vm451, %v454, %v457
    %v459 = vsel %vm449, nan, %v458
    %v460 = vmul.f32 %v356, %v243
    %v461 = vmul.f32 %v459, %v247
    %464 = vrot.lane.b32.xlu0 %v460, 16
    %v465 = vpop.permute.xlu0 %464
    %466 = vrot.lane.b32.xlu0 %v461, 16
    %v467 = vpop.permute.xlu0 %466
    %vm470 = vcmask 261248
    %471 = vst.msk [vmem:[#allocation2] sm:$0xff] %vm470, %v465
    %472 = vst.msk [vmem:[#allocation2 + $0x8] sm:$0xff] %vm470, %v467
    // Predicated region
    $region10: #{tpu_custom_call.1} parent=1 // pred_check
      _
    $region11: #{tpu_custom_call.1} parent=1 // pred_check_branch
      %474 = sbr.rel (0) target = $region13
    $region12: #{tpu_custom_call.1} parent=1 // pred_region
      %s476 = ssub.s32 256, 256
      %477 = vsyncadd [#allocation3], %s476
      %s478 = sshll.u32 [#allocation2], 4
      %s479 = int_to_ptr.vmem [resolvable:$true] %s478
      %484 = dma.vmem_to_hbm [thread:$0]  %s479, 256, %s2, [#allocation3], 128, 128, 8
    $region13: #{tpu_custom_call.1} parent=1 // pred_fallthru
      _
    // Predicated region
    $region14: #{tpu_custom_call.1} parent=1 // pred_check
      _
    $region15: #{tpu_custom_call.1} parent=1 // pred_check_branch
      %486 = sbr.rel (0) target = $region17
    $region16: #{tpu_custom_call.1} parent=1 // pred_region
      %487 = dma.done [#allocation3], 256
    $region17: #{tpu_custom_call.1} parent=1 // pred_fallthru
      _
    %488 = vsyncpa [#allocation3], 1

</llo_original>
